<compile_context>
chip_gen: v7x
topology: tpu7x:2x2x1
jax: 0.10.0
libtpu: 0.0.40
codegen_flags: <defaults>
</compile_context>

<pallas_src>
import functools

import numpy as np
import jax
import jax.numpy as jnp
from jax.experimental import pallas as pl
from jax.experimental.pallas import tpu as pltpu


def _mlp_kernel(*refs, use_dropout):
    """relu(x@W1+b1)[*m1] -> relu(.@W2+b2)[*m2] -> .@W3  for one batch tile."""
    if use_dropout:
        x_ref, w1_ref, b1_ref, m1_ref, w2_ref, b2_ref, m2_ref, w3_ref, o_ref = refs
    else:
        x_ref, w1_ref, b1_ref, w2_ref, b2_ref, w3_ref, o_ref = refs
        m1_ref = m2_ref = None

    # bf16 MXU operands, f32 accumulation.  x is cast here (VPU work hidden
    # under the matmuls) instead of in a separate wrapper HBM pass.
    x = x_ref[...].astype(jnp.bfloat16)

    # fc1 + ReLU (+ dropout; the 1/keep scale is folded into W2 on the host).
    z1 = jnp.dot(x, w1_ref[...], preferred_element_type=jnp.float32) + b1_ref[...]
    h1 = jnp.maximum(z1, 0.0)
    if use_dropout:
        h1 = jnp.where(m1_ref[...] != 0, h1, 0.0)
    a1 = h1.astype(jnp.bfloat16)          # cast fused right after the select

    # fc2 + ReLU (+ dropout; 1/keep folded into W3).
    z2 = jnp.dot(a1, w2_ref[...], preferred_element_type=jnp.float32) + b2_ref[...]
    h2 = jnp.maximum(z2, 0.0)
    if use_dropout:
        h2 = jnp.where(m2_ref[...] != 0, h2, 0.0)
    a2 = h2.astype(jnp.bfloat16)

    # fc3 (no bias).
    o_ref[...] = jnp.dot(a2, w3_ref[...],
                         preferred_element_type=jnp.float32).astype(o_ref.dtype)


def _round_up(v, m):
    return ((v + m - 1) // m) * m


def _resident_spec(block_shape):
    """Constant-index resident block (weights/biases).  Single pipeline buffer:
    these are never re-fetched, so double-buffering only wastes VMEM."""
    index_map = lambda i: (0,) * len(block_shape)
    if hasattr(pl, "Buffered"):
        try:
            return pl.BlockSpec(block_shape, index_map,
                                pipeline_mode=pl.Buffered(1))
        except TypeError:   # older BlockSpec signature without pipeline_mode
            pass
    return pl.BlockSpec(block_shape, index_map)


def _vmem_limit_bytes(needed_bytes):
    """Per-generation VMEM budget instead of one fixed 64 MiB cap."""
    cap = 64 << 20                      # assume the smallest (v7x) if unknown
    try:
        cap = int(pltpu.get_tpu_info().vmem_capacity_bytes)
    except Exception:
        pass
    ceiling = int(cap * 0.8)            # headroom for compiler-internal scratch
    return int(min(max(int(needed_bytes), 16 << 20), ceiling))


def two_layer_dropout_fc(x, w1, b1, w2, b2, w3, *, dropout_p=0.0, seed=0,
                         batch_tile=256, out_dtype=jnp.float32):
    """Fused forward of TwoLayerDropoutFullyConnected.

    x: [B, in]; w1: [in, h1]; b1: [1, h1]; w2: [h1, h2]; b2: [1, h2];
    w3: [h2, out] (fc3 has no bias).  Returns [B, out] in out_dtype.
    Dropout (training mode) is applied when dropout_p > 0.
    """
    assert 0.0 <= float(dropout_p) < 1.0
    batch, in_dims = x.shape
    h1 = w1.shape[1]
    h2 = w2.shape[1]
    out_dims = w3.shape[1]
    keep = 1.0 - float(dropout_p)
    use_dropout = float(dropout_p) > 0.0

    # Fold the inverted-dropout 1/keep scale into the next layer's weights
    # (linear, commutes with the following matmul -> zero in-kernel cost).
    if use_dropout:
        w2 = w2 / keep
        w3 = w3 / keep

    # bf16 MXU operands (weights only; x stays untouched in HBM).
    w1_bf = jnp.asarray(w1, jnp.bfloat16)
    w2_bf = jnp.asarray(w2, jnp.bfloat16)
    w3_bf = jnp.asarray(w3, jnp.bfloat16)
    b1_f = jnp.asarray(b1, jnp.float32).reshape(1, h1)
    b2_f = jnp.asarray(b2, jnp.float32).reshape(1, h2)

    # Lane-dense fc3 output only when the true width is large enough for the
    # unmasked-store win to beat the extra MXU/HBM work of zero columns.
    out_pad = out_dims
    if out_dims % 128 != 0 and out_dims >= 64:
        out_pad = _round_up(out_dims, 128)
        w3_bf = jnp.pad(w3_bf, ((0, 0), (0, out_pad - out_dims)))

    # Batch tiling: multiple of 16 rows (bf16 sublane packing); default 256-row
    # tile fills the 256x256 MXU on v6e/v7x (128 suffices on v5e).  The ragged
    # last tile is handled by the grid itself -- no jnp.pad pass over x.
    tm = max(16, min(_round_up(batch_tile, 16), _round_up(batch, 16)))
    n_tiles = pl.cdiv(batch, tm)

    operands = [x, w1_bf, b1_f]
    in_specs = [
        pl.BlockSpec((tm, in_dims), lambda i: (i, 0)),   # x streams per tile
        _resident_spec((in_dims, h1)),
        _resident_spec((1, h1)),
    ]
    if use_dropout:
        # {0,1} bf16 masks streamed per batch tile.
        # TODO(synk): in-kernel pltpu.prng_random_bits would avoid this HBM
        #             traffic but has no interpret/CPU lowering.
        km1, km2 = jax.random.split(jax.random.PRNGKey(seed))
        m1 = jax.random.bernoulli(km1, keep, (batch, h1)).astype(jnp.bfloat16)
        m2 = jax.random.bernoulli(km2, keep, (batch, h2)).astype(jnp.bfloat16)
        operands += [m1, w2_bf, b2_f, m2, w3_bf]
        in_specs += [
            pl.BlockSpec((tm, h1), lambda i: (i, 0)),
            _resident_spec((h1, h2)),
            _resident_spec((1, h2)),
            pl.BlockSpec((tm, h2), lambda i: (i, 0)),
            _resident_spec((h2, out_pad)),
        ]
    else:
        operands += [w2_bf, b2_f, w3_bf]
        in_specs += [
            _resident_spec((h1, h2)),
            _resident_spec((1, h2)),
            _resident_spec((h2, out_pad)),
        ]

    # Explicit VMEM accounting: single-buffered resident weights, double-
    # buffered streamed tiles, activation temporaries, headroom.
    out_bytes = np.dtype(out_dtype).itemsize
    resident = 2 * (in_dims * h1 + h1 * h2 + h2 * out_pad) + 4 * (h1 + h2)
    streamed = tm * in_dims * x.dtype.itemsize + tm * out_pad * out_bytes
    if use_dropout:
        streamed += 2 * tm * (h1 + h2)
    activations = 4 * tm * (h1 + h2 + out_pad)
    needed = resident + 2 * streamed + activations + (4 << 20)

    kernel = functools.partial(_mlp_kernel, use_dropout=use_dropout)
    out = pl.pallas_call(
        kernel,
        out_shape=jax.ShapeDtypeStruct((batch, out_pad), out_dtype),
        grid_spec=pltpu.PrefetchScalarGridSpec(
            num_scalar_prefetch=0,
            grid=(n_tiles,),
            in_specs=in_specs,
            out_specs=pl.BlockSpec((tm, out_pad), lambda i: (i, 0)),
        ),
        compiler_params=pltpu.CompilerParams(
            dimension_semantics=("parallel",),   # >=2 tiles -> both TCs on v7x
            vmem_limit_bytes=_vmem_limit_bytes(needed),
        ),
    )(*operands)

    if out_pad != out_dims:
        out = out[:, :out_dims]
    return out


def _init_params(key, input_dims, h1_dims, h2_dims, output_dims):
    """Deterministic init mimicking nn.Linear's U(-1/sqrt(fan_in), 1/sqrt(fan_in))."""
    k1, k2, k3, k4, k5 = jax.random.split(key, 5)

    def unif(k, shape, fan_in):
        bound = 1.0 / jnp.sqrt(float(fan_in))
        return jax.random.uniform(k, shape, jnp.float32, -bound, bound)

    w1 = unif(k1, (input_dims, h1_dims), input_dims)   # stored as [in, out]
    b1 = unif(k2, (1, h1_dims), input_dims)
    w2 = unif(k3, (h1_dims, h2_dims), h1_dims)
    b2 = unif(k4, (1, h2_dims), h1_dims)
    w3 = unif(k5, (h2_dims, output_dims), h2_dims)     # fc3 has no bias
    return w1, b1, w2, b2, w3


def _ref_forward(x, w1, b1, w2, b2, w3):
    """Pure-JAX reference (p=0 path) using the same bf16-in / f32-acc recipe."""
    z1 = jnp.dot(x.astype(jnp.bfloat16), w1.astype(jnp.bfloat16),
                 preferred_element_type=jnp.float32) + b1
    x1 = jnp.maximum(z1, 0.0)
    z2 = jnp.dot(x1.astype(jnp.bfloat16), w2.astype(jnp.bfloat16),
                 preferred_element_type=jnp.float32) + b2
    x2 = jnp.maximum(z2, 0.0)
    return jnp.dot(x2.astype(jnp.bfloat16), w3.astype(jnp.bfloat16),
                   preferred_element_type=jnp.float32)


if __name__ == "__main__":
    # Small, module-consistent shapes.
    batch, input_dims, h1_dims, h2_dims, output_dims = 8, 32, 64, 64, 16

    key = jax.random.PRNGKey(0)
    kx, kp = jax.random.split(key)
    x = jax.random.normal(kx, (batch, input_dims), dtype=jnp.float32)
    w1, b1, w2, b2, w3 = _init_params(kp, input_dims, h1_dims, h2_dims, output_dims)

    # p = 0 (module default / eval mode): compare against the JAX reference.
    out = jax.block_until_ready(
        two_layer_dropout_fc(x, w1, b1, w2, b2, w3, dropout_p=0.0, seed=0))
    ref = _ref_forward(x, w1, b1, w2, b2, w3)
    assert out.shape == (batch, output_dims)
    assert jnp.allclose(out, ref, atol=1e-2, rtol=1e-2)

    # p > 0 (training mode): exercises the streamed dropout-mask path.
    out_drop = jax.block_until_ready(
        two_layer_dropout_fc(x, w1, b1, w2, b2, w3, dropout_p=0.5, seed=123))
    assert out_drop.shape == (batch, output_dims)
    assert bool(jnp.all(jnp.isfinite(out_drop)))

    print("KERNEL_OK")
</pallas_src>

<mosaic_0001>
module attributes {stable_mosaic.version = 11 : i64} {
  func.func @_mlp_kernel(%arg0: i32, %arg1: memref<16x32xf32, #tpu.memory_space<vmem>>, %arg2: memref<32x64xbf16, #tpu.memory_space<vmem>>, %arg3: memref<1x64xf32, #tpu.memory_space<vmem>>, %arg4: memref<64x64xbf16, #tpu.memory_space<vmem>>, %arg5: memref<1x64xf32, #tpu.memory_space<vmem>>, %arg6: memref<64x16xbf16, #tpu.memory_space<vmem>>, %arg7: memref<16x16xf32, #tpu.memory_space<vmem>>) attributes {dimension_semantics = [#tpu.dimension_semantics<parallel>], iteration_bounds = array<i64: 1>, scalar_prefetch = 0 : i64, scratch_operands = 0 : i64, tpu.core_type = #tpu.core_type<tc>, window_params = [{transform_indices = @transform_0, window_bounds = array<i64: 16, 32>}, {pipeline_mode = #tpu.pipeline_mode<synchronous>, transform_indices = @transform_1, window_bounds = array<i64: 32, 64>}, {pipeline_mode = #tpu.pipeline_mode<synchronous>, transform_indices = @transform_2, window_bounds = array<i64: 1, 64>}, {pipeline_mode = #tpu.pipeline_mode<synchronous>, transform_indices = @transform_3, window_bounds = array<i64: 64, 64>}, {pipeline_mode = #tpu.pipeline_mode<synchronous>, transform_indices = @transform_4, window_bounds = array<i64: 1, 64>}, {pipeline_mode = #tpu.pipeline_mode<synchronous>, transform_indices = @transform_5, window_bounds = array<i64: 64, 16>}, {transform_indices = @transform_6, window_bounds = array<i64: 16, 16>}]} {
    %c0 = arith.constant 0 : index
    %c0_0 = arith.constant 0 : index
    %0 = vector.load %arg1[%c0, %c0_0] : memref<16x32xf32, #tpu.memory_space<vmem>>, vector<16x32xf32>
    %1 = arith.truncf %0 : vector<16x32xf32> to vector<16x32xbf16>
    %c0_1 = arith.constant 0 : index
    %c0_2 = arith.constant 0 : index
    %2 = vector.load %arg2[%c0_1, %c0_2] : memref<32x64xbf16, #tpu.memory_space<vmem>>, vector<32x64xbf16>
    %cst = arith.constant dense<0.000000e+00> : vector<16x64xf32>
    %3 = tpu.matmul %1, %2, %cst {dimension_numbers = #tpu.dot_dimension_numbers<[1], [0], [0], [1], [0, 0, 1, 1], [], []>} : vector<16x32xbf16>, vector<32x64xbf16>, vector<16x64xf32> -> vector<16x64xf32>
    %c0_3 = arith.constant 0 : index
    %c0_4 = arith.constant 0 : index
    %4 = vector.load %arg3[%c0_3, %c0_4] : memref<1x64xf32, #tpu.memory_space<vmem>>, vector<1x64xf32>
    %5 = vector.broadcast %4 : vector<1x64xf32> to vector<16x64xf32>
    %6 = arith.addf %3, %5 : vector<16x64xf32>
    %cst_5 = arith.constant 0.000000e+00 : f32
    %7 = vector.broadcast %cst_5 : f32 to vector<16x64xf32>
    %8 = arith.maximumf %6, %7 : vector<16x64xf32>
    %9 = arith.truncf %8 : vector<16x64xf32> to vector<16x64xbf16>
    %c0_6 = arith.constant 0 : index
    %c0_7 = arith.constant 0 : index
    %10 = vector.load %arg4[%c0_6, %c0_7] : memref<64x64xbf16, #tpu.memory_space<vmem>>, vector<64x64xbf16>
    %cst_8 = arith.constant dense<0.000000e+00> : vector<16x64xf32>
    %11 = tpu.matmul %9, %10, %cst_8 {dimension_numbers = #tpu.dot_dimension_numbers<[1], [0], [0], [1], [0, 0, 1, 1], [], []>} : vector<16x64xbf16>, vector<64x64xbf16>, vector<16x64xf32> -> vector<16x64xf32>
    %c0_9 = arith.constant 0 : index
    %c0_10 = arith.constant 0 : index
    %12 = vector.load %arg5[%c0_9, %c0_10] : memref<1x64xf32, #tpu.memory_space<vmem>>, vector<1x64xf32>
    %13 = vector.broadcast %12 : vector<1x64xf32> to vector<16x64xf32>
    %14 = arith.addf %11, %13 : vector<16x64xf32>
    %cst_11 = arith.constant 0.000000e+00 : f32
    %15 = vector.broadcast %cst_11 : f32 to vector<16x64xf32>
    %16 = arith.maximumf %14, %15 : vector<16x64xf32>
    %17 = arith.truncf %16 : vector<16x64xf32> to vector<16x64xbf16>
    %c0_12 = arith.constant 0 : index
    %c0_13 = arith.constant 0 : index
    %18 = vector.load %arg6[%c0_12, %c0_13] : memref<64x16xbf16, #tpu.memory_space<vmem>>, vector<64x16xbf16>
    %cst_14 = arith.constant dense<0.000000e+00> : vector<16x16xf32>
    %19 = tpu.matmul %17, %18, %cst_14 {dimension_numbers = #tpu.dot_dimension_numbers<[1], [0], [0], [1], [0, 0, 1, 1], [], []>} : vector<16x64xbf16>, vector<64x16xbf16>, vector<16x16xf32> -> vector<16x16xf32>
    %c0_15 = arith.constant 0 : index
    %c0_16 = arith.constant 0 : index
    %20 = vector.load %arg7[%c0_15, %c0_16] : memref<16x16xf32, #tpu.memory_space<vmem>>, vector<16x16xf32>
    tpu.vector_store %arg7[%c0_15, %c0_16], %19 {strides = array<i32>} : memref<16x16xf32, #tpu.memory_space<vmem>>, vector<16x16xf32>,
    return
  }
  func.func @transform_0(%arg0: i32) -> (i32, i32) {
    %c0_i32 = arith.constant 0 : i32
    %c0_i32_0 = arith.constant 0 : i32
    return %arg0, %c0_i32 : i32, i32
  }
  func.func @transform_1(%arg0: i32) -> (i32, i32) {
    %c0_i32 = arith.constant 0 : i32
    %c0_i32_0 = arith.constant 0 : i32
    %c0_i32_1 = arith.constant 0 : i32
    return %c0_i32, %c0_i32_0 : i32, i32
  }
  func.func @transform_2(%arg0: i32) -> (i32, i32) {
    %c0_i32 = arith.constant 0 : i32
    %c0_i32_0 = arith.constant 0 : i32
    %c0_i32_1 = arith.constant 0 : i32
    return %c0_i32, %c0_i32_0 : i32, i32
  }
  func.func @transform_3(%arg0: i32) -> (i32, i32) {
    %c0_i32 = arith.constant 0 : i32
    %c0_i32_0 = arith.constant 0 : i32
    %c0_i32_1 = arith.constant 0 : i32
    return %c0_i32, %c0_i32_0 : i32, i32
  }
  func.func @transform_4(%arg0: i32) -> (i32, i32) {
    %c0_i32 = arith.constant 0 : i32
    %c0_i32_0 = arith.constant 0 : i32
    %c0_i32_1 = arith.constant 0 : i32
    return %c0_i32, %c0_i32_0 : i32, i32
  }
  func.func @transform_5(%arg0: i32) -> (i32, i32) {
    %c0_i32 = arith.constant 0 : i32
    %c0_i32_0 = arith.constant 0 : i32
    %c0_i32_1 = arith.constant 0 : i32
    return %c0_i32, %c0_i32_0 : i32, i32
  }
  func.func @transform_6(%arg0: i32) -> (i32, i32) {
    %c0_i32 = arith.constant 0 : i32
    %c0_i32_0 = arith.constant 0 : i32
    return %arg0, %c0_i32 : i32, i32
  }
}

</mosaic_0001>

<llo_original>
// kernel: tpu_custom_call.1
$region0: #{tpu_custom_call.1}
  #allocation0 [shape = 'u32[]', space=smem, size = 0x4, offset = 0x4, fixed_abs, tag = 'smem constant byte address 0x4 - core index']
  #allocation1 [shape = 'u32[144,128]{1,0:T(1,128)}', space=vmem, size = 0x12000, scoped, tag = 'internal scratch']
  %s0 = inlined_call_operand.hbm [shape: f32[8,32], index: 0, kind: input, shape index: {}]
  %s1 = inlined_call_operand.vmem [shape: bf16[32,64], index: 1, kind: input, shape index: {}]
  %s2 = inlined_call_operand.vmem [shape: f32[1,64], index: 2, kind: input, shape index: {}]
  %s3 = inlined_call_operand.vmem [shape: bf16[64,64], index: 3, kind: input, shape index: {}]
  %s4 = inlined_call_operand.vmem [shape: f32[1,64], index: 4, kind: input, shape index: {}]
  %s5 = inlined_call_operand.vmem [shape: bf16[64,16], index: 5, kind: input, shape index: {}]
  %s6 = inlined_call_operand.hbm [shape: f32[8,16], index: 6, kind: output, shape index: {}]
  %s7 = sld [smem:[#allocation0]]
  $region38: #{tpu_custom_call.1} parent=0
    _
  %s9 = ssub.s32 1, %s7
  %s10 = scalar_select 0, %s9, %s7
  $region1: #{tpu_custom_call.1} parent=0
    #allocation2 [shape = 'u8[8192]{0}', space=vmem, size = 0x2000, scoped, tag = 'input window, operand 0, single buffered']
    #allocation3 [shape = 's32[1]{0}', space=sflag, size = 0x4, scoped, tag = 'scoped memory for tpu_custom_call.1']
    #allocation4 [shape = 's32[1]{0}', space=sflag, size = 0x4, scoped, tag = 'scoped memory for tpu_custom_call.1']
    #allocation5 [shape = 'u8[8192]{0}', space=vmem, size = 0x2000, scoped, tag = 'output window, operand 0, single buffered']
    %11 = vsyncpa [#allocation3], 0
    %12 = vsyncpa [#allocation4], 0
    // Predicated region
    $region2: #{tpu_custom_call.1} parent=1 // pred_check
      _
    $region3: #{tpu_custom_call.1} parent=1 // pred_check_branch
      %14 = sbr.rel (0) target = $region5
    $region4: #{tpu_custom_call.1} parent=1 // pred_region
      %s16 = ssub.s32 256, 128
      %17 = vsyncadd [#allocation3], %s16
      %s18 = sshll.u32 [#allocation2], 4
      %s19 = int_to_ptr.vmem [resolvable:$true] %s18
      %24 = dma.hbm_to_vmem [thread:$0]  %s0, 128, %s19, [#allocation3], 128, 128, 8
    $region5: #{tpu_custom_call.1} parent=1 // pred_fallthru
      _
    // Predicated region
    $region6: #{tpu_custom_call.1} parent=1 // pred_check
      _
    $region7: #{tpu_custom_call.1} parent=1 // pred_check_branch
      %26 = sbr.rel (0) target = $region9
    $region8: #{tpu_custom_call.1} parent=1 // pred_region
      _
    $region9: #{tpu_custom_call.1} parent=1 // pred_fallthru
      _
    // Predicated region
    $region10: #{tpu_custom_call.1} parent=1 // pred_check
      _
    $region11: #{tpu_custom_call.1} parent=1 // pred_check_branch
      %28 = sbr.rel (0) target = $region13
    $region12: #{tpu_custom_call.1} parent=1 // pred_region
      _
    $region13: #{tpu_custom_call.1} parent=1 // pred_fallthru
      _
    // Predicated region
    $region14: #{tpu_custom_call.1} parent=1 // pred_check
      _
    $region15: #{tpu_custom_call.1} parent=1 // pred_check_branch
      %30 = sbr.rel (0) target = $region17
    $region16: #{tpu_custom_call.1} parent=1 // pred_region
      _
    $region17: #{tpu_custom_call.1} parent=1 // pred_fallthru
      _
    // Predicated region
    $region18: #{tpu_custom_call.1} parent=1 // pred_check
      _
    $region19: #{tpu_custom_call.1} parent=1 // pred_check_branch
      %32 = sbr.rel (0) target = $region21
    $region20: #{tpu_custom_call.1} parent=1 // pred_region
      _
    $region21: #{tpu_custom_call.1} parent=1 // pred_fallthru
      _
    // Predicated region
    $region22: #{tpu_custom_call.1} parent=1 // pred_check
      _
    $region23: #{tpu_custom_call.1} parent=1 // pred_check_branch
      %34 = sbr.rel (0) target = $region25
    $region24: #{tpu_custom_call.1} parent=1 // pred_region
      _
    $region25: #{tpu_custom_call.1} parent=1 // pred_fallthru
      _
    // Predicated region
    $region26: #{tpu_custom_call.1} parent=1 // pred_check
      _
    $region27: #{tpu_custom_call.1} parent=1 // pred_check_branch
      %36 = sbr.rel (0) target = $region29
    $region28: #{tpu_custom_call.1} parent=1 // pred_region
      %37 = dma.done [#allocation3], 256
    $region29: #{tpu_custom_call.1} parent=1 // pred_fallthru
      _
    %v39 = vld [vmem:[#allocation2] sm:$0xff]
    %v40 = vld [vmem:[#allocation2 + $0x8] sm:$0xff]
    %v41 = vpack.c.bf16 %v40, %v39
    %v42 = vld [vmem:[%s1] sm:$0xf]
    %v43 = vld [vmem:[%s1 + $0x4] sm:$0xf]
    %v44 = vld [vmem:[%s1 + $0x8] sm:$0xf]
    %v45 = vld [vmem:[%s1 + $0xc] sm:$0xf]
    %v46 = vld [vmem:[%s2] sm:$0x1]
    %v48 = vlaneseq
    %v49 = vshrl.u32 %v48, 7
    %v50 = vsub.s32 0, %v49
    %v51 = vrot.slane %v46, %v50
    %v57 = vunpack.c.l.b16 %v42
    %v58 = vunpack.c.l.b16 %v43
    %v59 = vunpack.c.l.b16 %v44
    %v60 = vunpack.c.l.b16 %v45
    %v61 = vpack.c.b16 %v58, %v57
    %v62 = vpack.c.b16 %v60, %v59
    %vm65 = vcmask 261120
    %v67 = vsel %vm65, %v41, 0
    %69 = vmatprep.subr.bf16.mxu0 0
    %70 = vmatpush1.bf16.msra.mxu0 %v61
    %71 = vmatprep.subr.bf16.mxu0 0
    %72 = vmatpush1.bf16.msra.mxu0 %v62
    %73 = vmatprep.subr.bf16.mxu0 0
    %74 = vmatpush1.bf16.msra.mxu0 0
    %75 = vmatprep.subr.bf16.mxu0 0
    %76 = vmatpush1.bf16.msra.mxu0 0
    %77 = vmatprep.subr.bf16.mxu0 0
    %78 = vmatpush1.bf16.msra.mxu0 0
    %79 = vmatprep.subr.bf16.mxu0 0
    %80 = vmatpush1.bf16.msra.mxu0 0
    %81 = vmatprep.subr.bf16.mxu0 0
    %82 = vmatpush1.bf16.msra.mxu0 0
    %83 = vmatprep.subr.bf16.mxu0 0
    %84 = vmatpush1.bf16.msra.mxu0 0
    %85 = vmatprep.subr.bf16.mxu0 0
    %86 = vmatpush1.bf16.msra.mxu0 0
    %87 = vmatprep.subr.bf16.mxu0 0
    %88 = vmatpush1.bf16.msra.mxu0 0
    %89 = vmatprep.subr.bf16.mxu0 0
    %90 = vmatpush1.bf16.msra.mxu0 0
    %91 = vmatprep.subr.bf16.mxu0 0
    %92 = vmatpush1.bf16.msra.mxu0 0
    %93 = vmatprep.subr.bf16.mxu0 0
    %94 = vmatpush1.bf16.msra.mxu0 0
    %95 = vmatprep.subr.bf16.mxu0 0
    %96 = vmatpush1.bf16.msra.mxu0 0
    %97 = vmatprep.subr.bf16.mxu0 0
    %98 = vmatpush1.bf16.msra.mxu0 0
    %99 = vmatprep.subr.bf16.mxu0 0
    %100 = vmatpush1.bf16.msra.mxu0 0
    %101 = vmatprep.mubr.bf16.mxu0 0
    %102 = vmatmul.mubr.bf16.gmra.mrb[0].mxu0 %v67
    %v103 = vpop.f32.mrb[0].mxu0
    %v104 = vadd.f32 %v51, %v103
    %v105 = vpop.f32.mrb[0].mxu0
    %v106 = vpop.f32.mrb[0].mxu0
    %v107 = vadd.f32 %v51, %v106
    %v108 = vpop.f32.mrb[0].mxu0
    %109 = vdwg.mxu0
    %v110 = vmax.f32 %v104, 0.0
    %v111 = vmax.f32 %v107, 0.0
    %v112 = vpack.c.bf16 %v111, %v110
    %v113 = vld [vmem:[%s3] sm:$0xf]
    %v114 = vld [vmem:[%s3 + $0x4] sm:$0xf]
    %v115 = vld [vmem:[%s3 + $0x8] sm:$0xf]
    %v116 = vld [vmem:[%s3 + $0xc] sm:$0xf]
    %v117 = vld [vmem:[%s3 + $0x10] sm:$0xf]
    %v118 = vld [vmem:[%s3 + $0x14] sm:$0xf]
    %v119 = vld [vmem:[%s3 + $0x18] sm:$0xf]
    %v120 = vld [vmem:[%s3 + $0x1c] sm:$0xf]
    %v121 = vld [vmem:[%s4] sm:$0x1]
    %v123 = vlaneseq
    %v124 = vshrl.u32 %v123, 7
    %v125 = vsub.s32 0, %v124
    %v126 = vrot.slane %v121, %v125
    %v136 = vunpack.c.l.b16 %v113
    %v137 = vunpack.c.l.b16 %v114
    %v138 = vunpack.c.l.b16 %v115
    %v139 = vunpack.c.l.b16 %v116
    %v140 = vunpack.c.l.b16 %v117
    %v141 = vunpack.c.l.b16 %v118
    %v142 = vunpack.c.l.b16 %v119
    %v143 = vunpack.c.l.b16 %v120
    %v144 = vpack.c.b16 %v137, %v136
    %v145 = vpack.c.b16 %v139, %v138
    %v146 = vpack.c.b16 %v141, %v140
    %v147 = vpack.c.b16 %v143, %v142
    %vm152 = vcmask 523264
    %v154 = vsel %vm152, %v112, 0
    %156 = vmatprep.subr.bf16.mxu0 0
    %157 = vmatpush1.bf16.msra.mxu0 %v144
    %158 = vmatprep.subr.bf16.mxu0 0
    %159 = vmatpush1.bf16.msra.mxu0 %v145
    %160 = vmatprep.subr.bf16.mxu0 0
    %161 = vmatpush1.bf16.msra.mxu0 %v146
    %162 = vmatprep.subr.bf16.mxu0 0
    %163 = vmatpush1.bf16.msra.mxu0 %v147
    %164 = vmatprep.subr.bf16.mxu0 0
    %165 = vmatpush1.bf16.msra.mxu0 0
    %166 = vmatprep.subr.bf16.mxu0 0
    %167 = vmatpush1.bf16.msra.mxu0 0
    %168 = vmatprep.subr.bf16.mxu0 0
    %169 = vmatpush1.bf16.msra.mxu0 0
    %170 = vmatprep.subr.bf16.mxu0 0
    %171 = vmatpush1.bf16.msra.mxu0 0
    %172 = vmatprep.subr.bf16.mxu0 0
    %173 = vmatpush1.bf16.msra.mxu0 0
    %174 = vmatprep.subr.bf16.mxu0 0
    %175 = vmatpush1.bf16.msra.mxu0 0
    %176 = vmatprep.subr.bf16.mxu0 0
    %177 = vmatpush1.bf16.msra.mxu0 0
    %178 = vmatprep.subr.bf16.mxu0 0
    %179 = vmatpush1.bf16.msra.mxu0 0
    %180 = vmatprep.subr.bf16.mxu0 0
    %181 = vmatpush1.bf16.msra.mxu0 0
    %182 = vmatprep.subr.bf16.mxu0 0
    %183 = vmatpush1.bf16.msra.mxu0 0
    %184 = vmatprep.subr.bf16.mxu0 0
    %185 = vmatpush1.bf16.msra.mxu0 0
    %186 = vmatprep.subr.bf16.mxu0 0
    %187 = vmatpush1.bf16.msra.mxu0 0
    %188 = vmatprep.mubr.bf16.mxu0 0
    %189 = vmatmul.mubr.bf16.gmra.mrb[0].mxu0 %v154
    %v190 = vpop.f32.mrb[0].mxu0
    %v191 = vadd.f32 %v126, %v190
    %v192 = vpop.f32.mrb[0].mxu0
    %v193 = vpop.f32.mrb[0].mxu0
    %v194 = vadd.f32 %v126, %v193
    %v195 = vpop.f32.mrb[0].mxu0
    %196 = vdwg.mxu0
    %v197 = vmax.f32 %v191, 0.0
    %v198 = vmax.f32 %v194, 0.0
    %v199 = vpack.c.bf16 %v198, %v197
    %v200 = vld [vmem:[%s5] sm:$0xf]
    %v201 = vld [vmem:[%s5 + $0x4] sm:$0xf]
    %v202 = vld [vmem:[%s5 + $0x8] sm:$0xf]
    %v203 = vld [vmem:[%s5 + $0xc] sm:$0xf]
    %v204 = vld [vmem:[%s5 + $0x10] sm:$0xf]
    %v205 = vld [vmem:[%s5 + $0x14] sm:$0xf]
    %v206 = vld [vmem:[%s5 + $0x18] sm:$0xf]
    %v207 = vld [vmem:[%s5 + $0x1c] sm:$0xf]
    %v216 = vunpack.c.l.b16 %v200
    %v217 = vunpack.c.l.b16 %v201
    %v218 = vunpack.c.l.b16 %v202
    %v219 = vunpack.c.l.b16 %v203
    %v220 = vunpack.c.l.b16 %v204
    %v221 = vunpack.c.l.b16 %v205
    %v222 = vunpack.c.l.b16 %v206
    %v223 = vunpack.c.l.b16 %v207
    %v224 = vpack.c.b16 %v217, %v216
    %v225 = vpack.c.b16 %v219, %v218
    %v226 = vpack.c.b16 %v221, %v220
    %v227 = vpack.c.b16 %v223, %v222
    %v233 = vsel %vm152, %v199, 0
    %235 = vmatprep.subr.bf16.mxu0 0
    %236 = vmatpush1.bf16.msra.mxu0 %v224
    %237 = vmatprep.subr.bf16.mxu0 0
    %238 = vmatpush1.bf16.msra.mxu0 %v225
    %239 = vmatprep.subr.bf16.mxu0 0
    %240 = vmatpush1.bf16.msra.mxu0 %v226
    %241 = vmatprep.subr.bf16.mxu0 0
    %242 = vmatpush1.bf16.msra.mxu0 %v227
    %243 = vmatprep.subr.bf16.mxu0 0
    %244 = vmatpush1.bf16.msra.mxu0 0
    %245 = vmatprep.subr.bf16.mxu0 0
    %246 = vmatpush1.bf16.msra.mxu0 0
    %247 = vmatprep.subr.bf16.mxu0 0
    %248 = vmatpush1.bf16.msra.mxu0 0
    %249 = vmatprep.subr.bf16.mxu0 0
    %250 = vmatpush1.bf16.msra.mxu0 0
    %251 = vmatprep.subr.bf16.mxu0 0
    %252 = vmatpush1.bf16.msra.mxu0 0
    %253 = vmatprep.subr.bf16.mxu0 0
    %254 = vmatpush1.bf16.msra.mxu0 0
    %255 = vmatprep.subr.bf16.mxu0 0
    %256 = vmatpush1.bf16.msra.mxu0 0
    %257 = vmatprep.subr.bf16.mxu0 0
    %258 = vmatpush1.bf16.msra.mxu0 0
    %259 = vmatprep.subr.bf16.mxu0 0
    %260 = vmatpush1.bf16.msra.mxu0 0
    %261 = vmatprep.subr.bf16.mxu0 0
    %262 = vmatpush1.bf16.msra.mxu0 0
    %263 = vmatprep.subr.bf16.mxu0 0
    %264 = vmatpush1.bf16.msra.mxu0 0
    %265 = vmatprep.subr.bf16.mxu0 0
    %266 = vmatpush1.bf16.msra.mxu0 0
    %267 = vmatprep.mubr.bf16.mxu0 0
    %268 = vmatmul.mubr.bf16.gmra.mrb[0].mxu0 %v233
    %v269 = vpop.f32.mrb[0].mxu0
    %v270 = vadd.f32 0.0, %v269
    %v271 = vpop.f32.mrb[0].mxu0
    %v272 = vpop.f32.mrb[0].mxu0
    %v273 = vadd.f32 0.0, %v272
    %v274 = vpop.f32.mrb[0].mxu0
    %275 = vdwg.mxu0
    %vm276 = vcmask 130048
    %277 = vst.msk [vmem:[#allocation5] sm:$0xff] %vm276, %v270
    %278 = vst.msk [vmem:[#allocation5 + $0x8] sm:$0xff] %vm276, %v273
    // Predicated region
    $region30: #{tpu_custom_call.1} parent=1 // pred_check
      _
    $region31: #{tpu_custom_call.1} parent=1 // pred_check_branch
      %280 = sbr.rel (0) target = $region33
    $region32: #{tpu_custom_call.1} parent=1 // pred_region
      %s282 = ssub.s32 256, 128
      %283 = vsyncadd [#allocation4], %s282
      %s284 = sshll.u32 [#allocation5], 4
      %s285 = int_to_ptr.vmem [resolvable:$true] %s284
      %290 = dma.vmem_to_hbm [thread:$0]  %s285, 128, %s6, [#allocation4], 128, 128, 8
    $region33: #{tpu_custom_call.1} parent=1 // pred_fallthru
      _
    // Predicated region
    $region34: #{tpu_custom_call.1} parent=1 // pred_check
      _
    $region35: #{tpu_custom_call.1} parent=1 // pred_check_branch
      %292 = sbr.rel (0) target = $region37
    $region36: #{tpu_custom_call.1} parent=1 // pred_region
      %293 = dma.done [#allocation4], 256
    $region37: #{tpu_custom_call.1} parent=1 // pred_fallthru
      _
    %294 = vsyncpa [#allocation3], 1
    %295 = vsyncpa [#allocation4], 1

</llo_original>
